<compile_context>
chip_gen: v6e
topology: v6e:2x2x1
jax: 0.10.0
libtpu: 0.0.40
codegen_flags: <defaults>
</compile_context>

<pallas_src>
import numpy as np
import jax
import jax.numpy as jnp
from jax import lax
from jax.experimental import pallas as pl
from jax.experimental.pallas import tpu as pltpu


C_IN, H, W = 4, 5, 5
P = H * W            # 25 input spatial positions
C1 = 8               # conv1 out channels
C2 = 4               # conv2 out channels
C3 = 8               # conv3 out channels
H3, W3 = 3, 5        # conv3 output spatial
P3 = H3 * W3         # 15

SLAB_ROWS, SLAB_COLS = 72, 128   # one lane-dense constant slab (f32)


def _build_conv3_selectors():
    """Constant (25,15) 0/1 matrices implementing conv3's pad/stride/dilation gather.

    With A_kw = w3[:, :, 0, kw] @ x_(4,25)  (shape (8,25), index p = r*5 + w'),
    conv3 output is  v2_flat = A_0 @ S0 + A_1 @ S1 + b3, where
      S_kw[r*5 + w', oh*5 + ow] = 1  iff  r == 2*oh  and  w' == ow - 1 + 2*kw
    (columns hitting the width padding stay all-zero).
    """
    s0 = np.zeros((P, P3), np.float32)
    s1 = np.zeros((P, P3), np.float32)
    for oh in range(H3):
        r = 2 * oh
        for ow in range(W3):
            col = oh * W3 + ow
            if ow >= 1:              # kw = 0 tap reads padded col `ow`  -> x col ow-1
                s0[r * W + (ow - 1), col] = 1.0
            if ow <= W3 - 2:         # kw = 1 tap reads padded col `ow+2` -> x col ow+1
                s1[r * W + (ow + 1), col] = 1.0
    return s0, s1


_S0_NP, _S1_NP = _build_conv3_selectors()


def _fused_conv_kernel(x_ref, slab_ref, out_ref):
    x = x_ref[...]                                                     # (4, 25)

    # ---- conv3: channel taps on the MXU, then one constant gather matmul ----
    w_stk = slab_ref[0:16, 0:4]                                        # rows 0:8 kw=0, 8:16 kw=1
    y = jnp.dot(w_stk, x, preferred_element_type=jnp.float32)          # (16, 25)
    scat = slab_ref[40:65, 0:32]                                       # (25, 32) = [S0 | 0 | S1 | 0]
    u = jnp.dot(y, scat, preferred_element_type=jnp.float32)           # (16, 32)
    b3_blk = slab_ref[32:40, 0:16]                                     # (8, 16), col 15 is zero
    out16 = u[0:8, 0:16] + u[8:16, 16:32] + b3_blk                     # cols 0:15 = conv3, col 15 = 0

    # ---- conv1∘conv2 folded offline: full (ci, p) contraction on the VPU/XLU ----
    acc = slab_ref[32:36, 16:17]                                       # (4,1) effective bias b2eff
    for ci in range(C_IN):                                             # unrolled at trace time
        w_ci = slab_ref[16 + 4 * ci:20 + 4 * ci, 0:25]                 # (4,25) = W2eff[:, ci, :]
        acc = acc + jnp.sum(w_ci * x[ci:ci + 1, :], axis=1, keepdims=True)

    out_ref[...] = out16                                               # one full (8,16) store
    out_ref[0:4, 15:16] = acc                                          # v1 in the spare lane column


def prepare_params(params):
    """One-time weight re-layout into a single pre-padded constant slab (72,128) f32."""
    w1, b1, w2, b2, w3, b3 = (np.asarray(p, np.float32) for p in params)

    # Fold conv1 (1x1) into conv2: exact linear-algebra composition, done once offline.
    w1_2d = w1.reshape(C1, C_IN)                                       # (8,4)
    w2_r = w2.reshape(C2, C1, P)                                       # (4,8,25)
    w2eff = np.einsum('ocp,ci->oip', w2_r, w1_2d)                      # (4,4,25)
    b2eff = b2 + np.einsum('ocp,c->o', w2_r, b1)                       # (4,)

    # conv3 taps stacked for one channel matmul.
    w3_k0 = w3[:, :, 0, 0]                                             # (8,4)
    w3_k1 = w3[:, :, 0, 1]                                             # (8,4)

    # Wide selector [S0 | 0 | S1 | 0] so the gather is a single MXU matmul and the
    # spare column (15) of the output stays zero for v1 to land in.
    scat_wide = np.zeros((P, 32), np.float32)
    scat_wide[:, 0:15] = _S0_NP
    scat_wide[:, 16:31] = _S1_NP

    slab = np.zeros((SLAB_ROWS, SLAB_COLS), np.float32)
    slab[0:8, 0:4] = w3_k0
    slab[8:16, 0:4] = w3_k1
    for ci in range(C_IN):
        slab[16 + 4 * ci:20 + 4 * ci, 0:25] = w2eff[:, ci, :]
    slab[32:40, 0:15] = b3.reshape(C3, 1)                              # pre-broadcast bias block
    slab[32:36, 16] = b2eff
    slab[40:65, 0:32] = scat_wide
    return jnp.asarray(slab)


def model_forward(x, slab):
    """x: (1, 4, 5, 5) float32 NCHW. Returns (v1 (1,4,1,1), v2 (1,8,3,5))."""
    x_mat = x.reshape(C_IN, P)                                         # contiguous reshape: free
    vmem = pltpu.MemorySpace.VMEM

    out = pl.pallas_call(
        _fused_conv_kernel,
        out_shape=jax.ShapeDtypeStruct((C3, 16), jnp.float32),
        in_specs=[pl.BlockSpec(memory_space=vmem),
                  pl.BlockSpec(memory_space=vmem)],
        out_specs=pl.BlockSpec(memory_space=vmem),
        compiler_params=pltpu.CompilerParams(vmem_limit_bytes=2 * 1024 * 1024),
        cost_estimate=pl.CostEstimate(flops=30000, transcendentals=0,
                                      bytes_accessed=38000),
    )(x_mat, slab)

    v2 = out[:, 0:15].reshape(1, C3, H3, W3)                           # wrapper slices: free
    v1 = out[0:4, 15:16].reshape(1, C2, 1, 1)
    return v1, v2


def init_params(key):
    ks = jax.random.split(key, 6)
    w1 = jax.random.normal(ks[0], (8, 4, 1, 1), jnp.float32) * 0.1
    b1 = jax.random.normal(ks[1], (8,), jnp.float32) * 0.1
    w2 = jax.random.normal(ks[2], (4, 8, 5, 5), jnp.float32) * 0.05
    b2 = jax.random.normal(ks[3], (4,), jnp.float32) * 0.05
    w3 = jax.random.normal(ks[4], (8, 4, 1, 2), jnp.float32) * 0.1
    b3 = jax.random.normal(ks[5], (8,), jnp.float32) * 0.1
    return w1, b1, w2, b2, w3, b3


def _reference(x, params):
    """Pure-JAX reference using lax.conv_general_dilated (for validation)."""
    w1, b1, w2, b2, w3, b3 = params
    dn = ('NCHW', 'OIHW', 'NCHW')
    y1 = lax.conv_general_dilated(x, w1, (1, 1), 'VALID',
                                  dimension_numbers=dn) + b1[None, :, None, None]
    v1 = lax.conv_general_dilated(y1, w2, (2, 2), 'VALID',
                                  dimension_numbers=dn) + b2[None, :, None, None]
    v2 = lax.conv_general_dilated(x, w3, (2, 1), ((0, 0), (1, 1)),
                                  rhs_dilation=(1, 2),
                                  dimension_numbers=dn) + b3[None, :, None, None]
    return v1, v2


if __name__ == "__main__":
    key = jax.random.PRNGKey(0)
    k_params, k_x, k_x1 = jax.random.split(key, 3)
    params = init_params(k_params)
    slab = prepare_params(params)        # one-time weight re-layout (not per forward)

    # The torch forward ignores its argument x1 and draws its own randn input;
    # we mirror that with a deterministic stand-in for torch.randn(1,4,5,5).
    # TODO(synk): in-module torch.randn has no in-kernel equivalent; x is supplied as data.
    x1 = jax.random.normal(k_x1, (1, 4, 5, 5), jnp.float32)   # unused, like the torch module
    x = jax.random.normal(k_x, (1, 4, 5, 5), jnp.float32)

    fwd = jax.jit(model_forward)
    v1, v2 = fwd(x, slab)
    jax.block_until_ready((v1, v2))

    assert v1.shape == (1, 4, 1, 1), v1.shape
    assert v2.shape == (1, 8, 3, 5), v2.shape

    r1, r2 = _reference(x, params)
    assert jnp.allclose(v1, r1, atol=1e-4), "conv1->conv2 mismatch"
    assert jnp.allclose(v2, r2, atol=1e-4), "conv3 mismatch"

    print("KERNEL_OK")
</pallas_src>

<mosaic_0001>
module attributes {stable_mosaic.version = 11 : i64} {
  func.func @_fused_conv_kernel(%arg0: memref<4x25xf32, #tpu.memory_space<vmem>>, %arg1: memref<72x128xf32, #tpu.memory_space<vmem>>, %arg2: memref<8x16xf32, #tpu.memory_space<vmem>>) attributes {dimension_semantics = [], scalar_prefetch = 0 : i64, scratch_operands = 0 : i64, tpu.core_type = #tpu.core_type<tc>} {
    %c0 = arith.constant 0 : index
    %c0_0 = arith.constant 0 : index
    %0 = vector.load %arg0[%c0, %c0_0] : memref<4x25xf32, #tpu.memory_space<vmem>>, vector<4x25xf32>
    %c0_1 = arith.constant 0 : index
    %c0_2 = arith.constant 0 : index
    %1 = vector.load %arg1[%c0_1, %c0_2] : memref<72x128xf32, #tpu.memory_space<vmem>>, vector<16x4xf32>
    %cst = arith.constant dense<0.000000e+00> : vector<16x25xf32>
    %2 = tpu.matmul %1, %0, %cst {dimension_numbers = #tpu.dot_dimension_numbers<[1], [0], [0], [1], [0, 0, 1, 1], [], []>} : vector<16x4xf32>, vector<4x25xf32>, vector<16x25xf32> -> vector<16x25xf32>
    %c40 = arith.constant 40 : index
    %c0_3 = arith.constant 0 : index
    %3 = vector.load %arg1[%c40, %c0_3] : memref<72x128xf32, #tpu.memory_space<vmem>>, vector<25x32xf32>
    %cst_4 = arith.constant dense<0.000000e+00> : vector<16x32xf32>
    %4 = tpu.matmul %2, %3, %cst_4 {dimension_numbers = #tpu.dot_dimension_numbers<[1], [0], [0], [1], [0, 0, 1, 1], [], []>} : vector<16x25xf32>, vector<25x32xf32>, vector<16x32xf32> -> vector<16x32xf32>
    %c32 = arith.constant 32 : index
    %c0_5 = arith.constant 0 : index
    %5 = vector.load %arg1[%c32, %c0_5] : memref<72x128xf32, #tpu.memory_space<vmem>>, vector<8x16xf32>
    %6 = vector.extract_strided_slice %4 {offsets = [0, 0], sizes = [8, 16], strides = [1, 1]} : vector<16x32xf32> to vector<8x16xf32>
    %7 = vector.extract_strided_slice %4 {offsets = [8, 16], sizes = [8, 16], strides = [1, 1]} : vector<16x32xf32> to vector<8x16xf32>
    %8 = arith.addf %6, %7 : vector<8x16xf32>
    %9 = arith.addf %8, %5 : vector<8x16xf32>
    %c32_6 = arith.constant 32 : index
    %c16 = arith.constant 16 : index
    %10 = vector.load %arg1[%c32_6, %c16] : memref<72x128xf32, #tpu.memory_space<vmem>>, vector<4x1xf32>
    %c16_7 = arith.constant 16 : index
    %c0_8 = arith.constant 0 : index
    %11 = vector.load %arg1[%c16_7, %c0_8] : memref<72x128xf32, #tpu.memory_space<vmem>>, vector<4x25xf32>
    %12 = vector.extract_strided_slice %0 {offsets = [0, 0], sizes = [1, 25], strides = [1, 1]} : vector<4x25xf32> to vector<1x25xf32>
    %13 = vector.broadcast %12 : vector<1x25xf32> to vector<4x25xf32>
    %14 = arith.mulf %11, %13 : vector<4x25xf32>
    %cst_9 = arith.constant dense<0.000000e+00> : vector<4xf32>
    %15 = vector.multi_reduction <add>, %14, %cst_9 [1] : vector<4x25xf32> to vector<4xf32>
    %16 = vector.shape_cast %15 : vector<4xf32> to vector<4x1xf32>
    %17 = arith.addf %10, %16 : vector<4x1xf32>
    %c20 = arith.constant 20 : index
    %c0_10 = arith.constant 0 : index
    %18 = vector.load %arg1[%c20, %c0_10] : memref<72x128xf32, #tpu.memory_space<vmem>>, vector<4x25xf32>
    %19 = vector.extract_strided_slice %0 {offsets = [1, 0], sizes = [1, 25], strides = [1, 1]} : vector<4x25xf32> to vector<1x25xf32>
    %20 = vector.broadcast %19 : vector<1x25xf32> to vector<4x25xf32>
    %21 = arith.mulf %18, %20 : vector<4x25xf32>
    %cst_11 = arith.constant dense<0.000000e+00> : vector<4xf32>
    %22 = vector.multi_reduction <add>, %21, %cst_11 [1] : vector<4x25xf32> to vector<4xf32>
    %23 = vector.shape_cast %22 : vector<4xf32> to vector<4x1xf32>
    %24 = arith.addf %17, %23 : vector<4x1xf32>
    %c24 = arith.constant 24 : index
    %c0_12 = arith.constant 0 : index
    %25 = vector.load %arg1[%c24, %c0_12] : memref<72x128xf32, #tpu.memory_space<vmem>>, vector<4x25xf32>
    %26 = vector.extract_strided_slice %0 {offsets = [2, 0], sizes = [1, 25], strides = [1, 1]} : vector<4x25xf32> to vector<1x25xf32>
    %27 = vector.broadcast %26 : vector<1x25xf32> to vector<4x25xf32>
    %28 = arith.mulf %25, %27 : vector<4x25xf32>
    %cst_13 = arith.constant dense<0.000000e+00> : vector<4xf32>
    %29 = vector.multi_reduction <add>, %28, %cst_13 [1] : vector<4x25xf32> to vector<4xf32>
    %30 = vector.shape_cast %29 : vector<4xf32> to vector<4x1xf32>
    %31 = arith.addf %24, %30 : vector<4x1xf32>
    %c28 = arith.constant 28 : index
    %c0_14 = arith.constant 0 : index
    %32 = vector.load %arg1[%c28, %c0_14] : memref<72x128xf32, #tpu.memory_space<vmem>>, vector<4x25xf32>
    %33 = vector.extract_strided_slice %0 {offsets = [3, 0], sizes = [1, 25], strides = [1, 1]} : vector<4x25xf32> to vector<1x25xf32>
    %34 = vector.broadcast %33 : vector<1x25xf32> to vector<4x25xf32>
    %35 = arith.mulf %32, %34 : vector<4x25xf32>
    %cst_15 = arith.constant dense<0.000000e+00> : vector<4xf32>
    %36 = vector.multi_reduction <add>, %35, %cst_15 [1] : vector<4x25xf32> to vector<4xf32>
    %37 = vector.shape_cast %36 : vector<4xf32> to vector<4x1xf32>
    %38 = arith.addf %31, %37 : vector<4x1xf32>
    %c0_16 = arith.constant 0 : index
    %c0_17 = arith.constant 0 : index
    %39 = vector.load %arg2[%c0_16, %c0_17] : memref<8x16xf32, #tpu.memory_space<vmem>>, vector<8x16xf32>
    tpu.vector_store %arg2[%c0_16, %c0_17], %9 {strides = array<i32>} : memref<8x16xf32, #tpu.memory_space<vmem>>, vector<8x16xf32>,
    %c0_18 = arith.constant 0 : index
    %c15 = arith.constant 15 : index
    %40 = vector.load %arg2[%c0_18, %c15] : memref<8x16xf32, #tpu.memory_space<vmem>>, vector<4x1xf32>
    tpu.vector_store %arg2[%c0_18, %c15], %38 {strides = array<i32>} : memref<8x16xf32, #tpu.memory_space<vmem>>, vector<4x1xf32>,
    return
  }
}

</mosaic_0001>

<llo_original>
// kernel: model_forward.1
$region0: #{model_forward.1}
  #allocation0 [shape = 'u32[]', space=smem, size = 0x4, offset = 0x4, fixed_abs, tag = 'smem constant byte address 0x4 - core index']
  #allocation1 [shape = 'u32[144,128]{1,0:T(1,128)}', space=vmem, size = 0x12000, scoped, tag = 'internal scratch']
  %s0 = inlined_call_operand.vmem [shape: f32[4,25], index: 0, kind: input, shape index: {}]
  %s1 = inlined_call_operand.vmem [shape: f32[72,128], index: 1, kind: input, shape index: {}]
  %s2 = inlined_call_operand.vmem [shape: f32[8,16], index: 2, kind: output, shape index: {}]
  %s3 = sld [smem:[#allocation0]]
  $region18: #{model_forward.1} parent=0
    _
  %s5 = ssub.s32 1, %s3
  %s6 = scalar_select 0, %s5, %s3
  // Predicated region
  $region2: #{model_forward.1} parent=0 // pred_check
    _
  $region3: #{model_forward.1} parent=0 // pred_check_branch
    %8 = sbr.rel (0) target = $region5
  $region4: #{model_forward.1} parent=0 // pred_region
    _
  $region5: #{model_forward.1} parent=0 // pred_fallthru
    _
  // Predicated region
  $region6: #{model_forward.1} parent=0 // pred_check
    _
  $region7: #{model_forward.1} parent=0 // pred_check_branch
    %10 = sbr.rel (0) target = $region9
  $region8: #{model_forward.1} parent=0 // pred_region
    _
  $region9: #{model_forward.1} parent=0 // pred_fallthru
    _
  %v11 = vld [vmem:[%s0] sm:$0xf]
  %v12 = vld [vmem:[%s1] sm:$0xff]
  %v13 = vld [vmem:[%s1 + $0x8] sm:$0xff]
  %vm14 = vcmask 31744
  %v16 = vsel %vm14, %v12, 0
  %v19 = vsel %vm14, %v13, 0
  %vm21 = vcmask 1043456
  %v23 = vsel %vm21, %v11, 0
  %25 = vmatprep.subr.mxu0 0.0
  %26 = vmatpush1.msra.mxu0 0.0
  %27 = vmatprep.subr.mxu0 0.0
  %28 = vmatpush1.msra.mxu0 0.0
  %29 = vmatprep.subr.mxu0 0.0
  %30 = vmatpush1.msra.mxu0 0.0
  %31 = vmatprep.subr.mxu0 0.0
  %32 = vmatpush1.msra.mxu0 0.0
  %33 = vmatprep.subr.mxu0 0.0
  %34 = vmatpush1.msra.mxu0 0.0
  %35 = vmatprep.subr.mxu0 0.0
  %36 = vmatpush1.msra.mxu0 0.0
  %37 = vmatprep.subr.mxu0 0.0
  %38 = vmatpush1.msra.mxu0 0.0
  %39 = vmatprep.subr.mxu0 0.0
  %40 = vmatpush1.msra.mxu0 0.0
  %41 = vmatprep.subr.mxu0 0.0
  %42 = vmatpush1.msra.mxu0 0.0
  %43 = vmatprep.subr.mxu0 0.0
  %44 = vmatpush1.msra.mxu0 0.0
  %45 = vmatprep.subr.mxu0 0.0
  %46 = vmatpush1.msra.mxu0 0.0
  %47 = vmatprep.subr.mxu0 0.0
  %48 = vmatpush1.msra.mxu0 0.0
  %49 = vmatprep.subr.mxu0 0.0
  %50 = vmatpush1.msra.mxu0 0.0
  %51 = vmatprep.subr.mxu0 0.0
  %52 = vmatpush1.msra.mxu0 0.0
  %53 = vmatprep.subr.mxu0 0.0
  %54 = vmatpush1.msra.mxu0 0.0
  %55 = vmatprep.subr.mxu0 0.0
  %56 = vmatpush1.msra.mxu0 %v23
  %57 = vmatprep.subr.mxu0 0.0
  %58 = vmatpush2.msra.mxu0 0.0
  %59 = vmatprep.subr.mxu0 0.0
  %60 = vmatpush2.msra.mxu0 0.0
  %61 = vmatprep.subr.mxu0 0.0
  %62 = vmatpush2.msra.mxu0 0.0
  %63 = vmatprep.subr.mxu0 0.0
  %64 = vmatpush2.msra.mxu0 0.0
  %65 = vmatprep.subr.mxu0 0.0
  %66 = vmatpush2.msra.mxu0 0.0
  %67 = vmatprep.subr.mxu0 0.0
  %68 = vmatpush2.msra.mxu0 0.0
  %69 = vmatprep.subr.mxu0 0.0
  %70 = vmatpush2.msra.mxu0 0.0
  %71 = vmatprep.subr.mxu0 0.0
  %72 = vmatpush2.msra.mxu0 0.0
  %73 = vmatprep.subr.mxu0 0.0
  %74 = vmatpush2.msra.mxu0 0.0
  %75 = vmatprep.subr.mxu0 0.0
  %76 = vmatpush2.msra.mxu0 0.0
  %77 = vmatprep.subr.mxu0 0.0
  %78 = vmatpush2.msra.mxu0 0.0
  %79 = vmatprep.subr.mxu0 0.0
  %80 = vmatpush2.msra.mxu0 0.0
  %81 = vmatprep.subr.mxu0 0.0
  %82 = vmatpush2.msra.mxu0 0.0
  %83 = vmatprep.subr.mxu0 0.0
  %84 = vmatpush2.msra.mxu0 0.0
  %85 = vmatprep.subr.mxu0 0.0
  %86 = vmatpush2.msra.mxu0 0.0
  %87 = vmatprep.subr.mxu0 0.0
  %88 = vmatpush2.msra.mxu0 0.0
  %89 = vmatprep.mubr.f32.mxu0 0.0
  %90 = vmatmul.mubr.f32.gmra.mxu0 %v16
  %v91 = vpop.f32.mrf.mxu0
  %v92 = vadd.f32 0.0, %v91
  %v93 = vpop.f32.mrf.mxu0
  %94 = vmatprep.mubr.f32.mxu0 0.0
  %95 = vmatmul.mubr.f32.gmra.mxu0 %v19
  %v96 = vpop.f32.mrf.mxu0
  %v97 = vadd.f32 0.0, %v96
  %v98 = vpop.f32.mrf.mxu0
  %99 = vdwg.mxu0
  %v100 = vld [vmem:[%s1 + $0x28] sm:$0xff]
  %v101 = vld [vmem:[%s1 + $0x30] sm:$0xff]
  %v102 = vld [vmem:[%s1 + $0x38] sm:$0xff]
  %v103 = vld [vmem:[%s1 + $0x40] sm:$0x1]
  %vm104 = vcmask 203776
  %v106 = vsel %vm104, %v92, 0
  %v109 = vsel %vm104, %v97, 0
  %vm111 = vcmask 1040384
  %v113 = vsel %vm111, %v103, 0
  %115 = vmatprep.subr.mxu0 0.0
  %116 = vmatpush1.msra.mxu0 0.0
  %117 = vmatprep.subr.mxu0 0.0
  %118 = vmatpush1.msra.mxu0 0.0
  %119 = vmatprep.subr.mxu0 0.0
  %120 = vmatpush1.msra.mxu0 0.0
  %121 = vmatprep.subr.mxu0 0.0
  %122 = vmatpush1.msra.mxu0 0.0
  %123 = vmatprep.subr.mxu0 0.0
  %124 = vmatpush1.msra.mxu0 0.0
  %125 = vmatprep.subr.mxu0 0.0
  %126 = vmatpush1.msra.mxu0 0.0
  %127 = vmatprep.subr.mxu0 0.0
  %128 = vmatpush1.msra.mxu0 0.0
  %129 = vmatprep.subr.mxu0 0.0
  %130 = vmatpush1.msra.mxu0 0.0
  %131 = vmatprep.subr.mxu0 0.0
  %132 = vmatpush1.msra.mxu0 0.0
  %133 = vmatprep.subr.mxu0 0.0
  %134 = vmatpush1.msra.mxu0 0.0
  %135 = vmatprep.subr.mxu0 0.0
  %136 = vmatpush1.msra.mxu0 0.0
  %137 = vmatprep.subr.mxu0 0.0
  %138 = vmatpush1.msra.mxu0 0.0
  %139 = vmatprep.subr.mxu0 0.0
  %140 = vmatpush1.msra.mxu0 %v113
  %141 = vmatprep.subr.mxu0 0.0
  %142 = vmatpush1.msra.mxu0 %v102
  %143 = vmatprep.subr.mxu0 0.0
  %144 = vmatpush1.msra.mxu0 %v101
  %145 = vmatprep.subr.mxu0 0.0
  %146 = vmatpush1.msra.mxu0 %v100
  %147 = vmatprep.subr.mxu0 0.0
  %148 = vmatpush2.msra.mxu0 0.0
  %149 = vmatprep.subr.mxu0 0.0
  %150 = vmatpush2.msra.mxu0 0.0
  %151 = vmatprep.subr.mxu0 0.0
  %152 = vmatpush2.msra.mxu0 0.0
  %153 = vmatprep.subr.mxu0 0.0
  %154 = vmatpush2.msra.mxu0 0.0
  %155 = vmatprep.subr.mxu0 0.0
  %156 = vmatpush2.msra.mxu0 0.0
  %157 = vmatprep.subr.mxu0 0.0
  %158 = vmatpush2.msra.mxu0 0.0
  %159 = vmatprep.subr.mxu0 0.0
  %160 = vmatpush2.msra.mxu0 0.0
  %161 = vmatprep.subr.mxu0 0.0
  %162 = vmatpush2.msra.mxu0 0.0
  %163 = vmatprep.subr.mxu0 0.0
  %164 = vmatpush2.msra.mxu0 0.0
  %165 = vmatprep.subr.mxu0 0.0
  %166 = vmatpush2.msra.mxu0 0.0
  %167 = vmatprep.subr.mxu0 0.0
  %168 = vmatpush2.msra.mxu0 0.0
  %169 = vmatprep.subr.mxu0 0.0
  %170 = vmatpush2.msra.mxu0 0.0
  %171 = vmatprep.subr.mxu0 0.0
  %172 = vmatpush2.msra.mxu0 0.0
  %173 = vmatprep.subr.mxu0 0.0
  %174 = vmatpush2.msra.mxu0 0.0
  %175 = vmatprep.subr.mxu0 0.0
  %176 = vmatpush2.msra.mxu0 0.0
  %177 = vmatprep.subr.mxu0 0.0
  %178 = vmatpush2.msra.mxu0 0.0
  %179 = vmatprep.mubr.f32.mxu0 0.0
  %180 = vmatmul.mubr.f32.gmra.mxu0 %v106
  %v181 = vpop.f32.mrf.mxu0
  %v182 = vadd.f32 0.0, %v181
  %v183 = vpop.f32.mrf.mxu0
  %184 = vmatprep.mubr.f32.mxu0 0.0
  %185 = vmatmul.mubr.f32.gmra.mxu0 %v109
  %v186 = vpop.f32.mrf.mxu0
  %v187 = vadd.f32 0.0, %v186
  %v188 = vpop.f32.mrf.mxu0
  %189 = vdwg.mxu0
  %v190 = vld [vmem:[%s1 + $0x20] sm:$0xff]
  %192 = vrot.lane.b32.xlu0 %v187, 112
  %v193 = vpop.permute.xlu0 %192
  %v195 = vadd.f32 %v182, %v193
  %v196 = vadd.f32 %v195, %v190
  %v197 = vld [vmem:[%s1 + $0x20] sm:$0xf]
  %v198 = vld [vmem:[%s1 + $0x10] sm:$0xf]
  %v199 = vlaneseq
  %v200 = vshrl.u32 %v199, 7
  %v201 = vsub.s32 0, %v200
  %v202 = vrot.slane %v11, %v201
  %v203 = vmul.f32 %v198, %v202
  %vm204 = vcmask 199680
  %v205 = vsel %vm204, %v203, 0.0
  %206 = vadd.xlane.f32.xlu0 %v205
  %v207 = vpop.xlane.xlu0 %206
  %v208 = vadd.f32 %v197, %v207
  %v209 = vld [vmem:[%s1 + $0x14] sm:$0xf]
  %v210 = vlaneseq
  %v211 = vshrl.u32 %v210, 7
  %v212 = vsub.s32 1, %v211
  %v213 = vrot.slane %v11, %v212
  %v214 = vmul.f32 %v209, %v213
  %v215 = vsel %vm204, %v214, 0.0
  %216 = vadd.xlane.f32.xlu0 %v215
  %v217 = vpop.xlane.xlu0 %216
  %v218 = vadd.f32 %v208, %v217
  %v219 = vld [vmem:[%s1 + $0x18] sm:$0xf]
  %v220 = vlaneseq
  %v221 = vshrl.u32 %v220, 7
  %v222 = vsub.s32 2, %v221
  %v223 = vrot.slane %v11, %v222
  %v224 = vmul.f32 %v219, %v223
  %v225 = vsel %vm204, %v224, 0.0
  %226 = vadd.xlane.f32.xlu0 %v225
  %v227 = vpop.xlane.xlu0 %226
  %v228 = vadd.f32 %v218, %v227
  %v229 = vld [vmem:[%s1 + $0x1c] sm:$0xf]
  %v230 = vlaneseq
  %v231 = vshrl.u32 %v230, 7
  %v232 = vsub.s32 3, %v231
  %v233 = vrot.slane %v11, %v232
  %v234 = vmul.f32 %v229, %v233
  %v235 = vsel %vm204, %v234, 0.0
  %236 = vadd.xlane.f32.xlu0 %v235
  %v237 = vpop.xlane.xlu0 %236
  %v238 = vadd.f32 %v228, %v237
  %vm239 = vcmask 130048
  %240 = vst.msk [vmem:[%s2] sm:$0xff] %vm239, %v196
  %242 = vrot.lane.b32.xlu0 %v238, 127
  %v243 = vpop.permute.xlu0 %242
  %vm245 = vcmask 126072
  %246 = vst.msk [vmem:[%s2] sm:$0xf] %vm245, %v243
  // Predicated region
  $region10: #{model_forward.1} parent=0 // pred_check
    _
  $region11: #{model_forward.1} parent=0 // pred_check_branch
    %248 = sbr.rel (0) target = $region13
  $region12: #{model_forward.1} parent=0 // pred_region
    _
  $region13: #{model_forward.1} parent=0 // pred_fallthru
    _
  // Predicated region
  $region14: #{model_forward.1} parent=0 // pred_check
    _
  $region15: #{model_forward.1} parent=0 // pred_check_branch
    %250 = sbr.rel (0) target = $region17
  $region16: #{model_forward.1} parent=0 // pred_region
    _
  $region17: #{model_forward.1} parent=0 // pred_fallthru
    _

</llo_original>
